<compile_context>
chip_gen: v5e
topology: v5e:2x2
jax: 0.10.0
libtpu: 0.0.40
codegen_flags: <defaults>
</compile_context>

<pallas_src>
import functools

import jax
import jax.numpy as jnp
from jax import lax
from jax.experimental import pallas as pl
from jax.experimental.pallas import tpu as pltpu

EPS = 1e-5
LEAKY_SLOPE = 0.01  # PyTorch nn.LeakyReLU default


def _residual_cnn_kernel(x_ref, b1_ref, b2_ref, sdn_ref, sup_ref,
                         sh1_ref, sho_ref, out_ref, *, bb, H, Wci, Cpad):
    """bb batch images per grid step, collapsed into the matmul M dimension.

    x_ref   : (bb, H, W*Cin)      un-padded NHWC slab, (w, cin) flattened into lanes
    b1_ref  : (W*Cin, 4*Cpad)     [conv1 dy0 | dy1 | dy2 | 1x1 resize] banded weights
                                  (BN1 scale folded into the conv1 blocks)
    b2_ref  : (Cpad, 3*Cpad)      [conv2 dy0 | dy1 | dy2] banded weights (BN2 scale folded)
    sdn_ref : (M, M)              shift-down-one-row matrix (zeros at image-top rows)
    sup_ref : (M, M)              shift-up-one-row matrix (zeros at image-bottom rows)
    sh1_ref : (1, Cpad)           BN1 shift (pre-LeakyReLU)
    sho_ref : (1, Cpad)           BN2 shift + resize bias (pre-ReLU)
    out_ref : (bb, H, Cpad)       lane-dense output slab
    """
    M = bb * H
    X = x_ref[...].reshape(M, Wci)                       # layout no-op reshape
    Sdn = sdn_ref[...]
    Sup = sup_ref[...]

    # --- conv1 (3 vertical taps) + 1x1 resize: one MXU push, then row shifts ---
    T = jnp.dot(X, b1_ref[...], preferred_element_type=jnp.float32)   # (M, 4*Cpad)
    z1 = (jnp.dot(Sdn, T[:, 0:Cpad], preferred_element_type=jnp.float32)
          + T[:, Cpad:2 * Cpad]
          + jnp.dot(Sup, T[:, 2 * Cpad:3 * Cpad], preferred_element_type=jnp.float32)
          + sh1_ref[...])
    y1 = jnp.maximum(z1, LEAKY_SLOPE * z1)               # LeakyReLU, no select
    r = T[:, 3 * Cpad:4 * Cpad]                          # 1x1 resize (bias in sho)
    # TODO(synk): Dropout(p=0.25) inside the block — identity under inference.

    # --- conv2 (3 vertical taps): one MXU push, then row shifts -----------------
    U = jnp.dot(y1, b2_ref[...], preferred_element_type=jnp.float32)  # (M, 3*Cpad)
    y2 = (jnp.dot(Sdn, U[:, 0:Cpad], preferred_element_type=jnp.float32)
          + U[:, Cpad:2 * Cpad]
          + jnp.dot(Sup, U[:, 2 * Cpad:3 * Cpad], preferred_element_type=jnp.float32))

    # --- residual add + ReLU, full unmasked lane-dense store --------------------
    out_ref[...] = jnp.maximum(y2 + r + sho_ref[...], 0.0).reshape(bb, H, Cpad)
    # TODO(synk): trailing Dropout(p=0.25) — identity under inference.


def _pad_cols(a, cols):
    return a if a.shape[1] == cols else jnp.pad(a, ((0, 0), (0, cols - a.shape[1])))


def _banded_dy(w_dy, W, Cpad):
    """One vertical tap (3, Ci, Co) -> banded (W*Ci, Cpad) matrix over un-padded width.

    band[wi*Ci+ci, wo*Co+co] = w_dy[wi-wo+1, ci, co] if 0 <= wi-wo+1 < 3 else 0
    (out-of-range horizontal taps get zero weight == SAME zero-padding).
    """
    _, Ci, Co = w_dy.shape
    wi = jnp.arange(W)[:, None, None]
    wo = jnp.arange(W)[None, :, None]
    dx = jnp.arange(3)[None, None, :]
    sel = (wi == wo + dx - 1).astype(jnp.float32)         # (W, W, 3)
    band = jnp.einsum('iox,xcd->icod', sel, w_dy)         # (W, Ci, W, Co)
    return _pad_cols(band.reshape(W * Ci, W * Co), Cpad)


def _blockdiag_1x1(wr, W, Cpad):
    """(Ci, Co) 1x1 conv -> block-diagonal (W*Ci, Cpad) matrix (same-column only)."""
    Ci, Co = wr.shape
    eye = jnp.eye(W, dtype=jnp.float32)
    blk = jnp.einsum('io,cd->icod', eye, wr).reshape(W * Ci, W * Co)
    return _pad_cols(blk, Cpad)


def residual_cnn_forward(x_nchw, params, *, rows_target=128):
    """Pallas forward. x_nchw: (N, Cin, H, W) float32 -> (N, Cout, H, W)."""
    x = jnp.transpose(x_nchw, (0, 2, 3, 1)).astype(jnp.float32)  # NHWC (module boundary)
    N, H, W, Cin = x.shape
    Cout = params["w1"].shape[-1]
    Wci = W * Cin
    WCo = W * Cout
    Cpad = pl.cdiv(WCo, 128) * 128                       # lane-dense output width

    # Batch-block: pack images into the matmul M dim (target ~128 rows), but
    # keep >= 2 parallel grid steps when N allows so both v7x TCs are loaded.
    bb = max(1, min(N, rows_target // max(H, 1)))
    if N >= 2:
        bb = max(1, min(bb, N // 2))
    while N % bb:
        bb -= 1
    M = bb * H

    # Fold BN running stats + conv biases into per-channel scale/shift; fold
    # the scales into the conv weights (weight-side, amortized per layer).
    inv1 = params["gamma1"] / jnp.sqrt(params["var1"] + EPS)
    inv2 = params["gamma2"] / jnp.sqrt(params["var2"] + EPS)
    t1 = params["beta1"] + (params["b1"] - params["mean1"]) * inv1
    t2 = params["beta2"] + (params["b2"] - params["mean2"]) * inv2
    w1 = params["w1"] * inv1                              # (3,3,Cin,Cout)
    w2 = params["w2"] * inv2                              # (3,3,Cout,Cout)

    # RHS column blocks: [conv1 dy0 | dy1 | dy2 | resize] and [conv2 dy0 | dy1 | dy2].
    B1 = jnp.concatenate([_banded_dy(w1[0], W, Cpad),
                          _banded_dy(w1[1], W, Cpad),
                          _banded_dy(w1[2], W, Cpad),
                          _blockdiag_1x1(params["wr"], W, Cpad)], axis=1)
    B2 = jnp.concatenate([_banded_dy(w2[0], W, Cpad),
                          _banded_dy(w2[1], W, Cpad),
                          _banded_dy(w2[2], W, Cpad)], axis=1)
    if B2.shape[0] != Cpad:                               # conv2 K dim = y1 lane dim
        B2 = jnp.pad(B2, ((0, Cpad - B2.shape[0]), (0, 0)))

    def pad_vec(v):
        return (v if v.shape[0] == Cpad else jnp.pad(v, (0, Cpad - v.shape[0]))).reshape(1, Cpad)

    sh1 = pad_vec(jnp.tile(t1, W))                                   # pre-LeakyReLU
    sho = pad_vec(jnp.tile(t2, W) + jnp.tile(params["br"], W))       # pre-ReLU

    # Shift matrices: row i takes row i-1 (Sdn) / i+1 (Sup) of the same image,
    # zero at image boundaries — exact (0/1 entries), block-diagonal per image.
    ridx = jnp.arange(M)
    img = ridx // H
    same = img[:, None] == img[None, :]
    Sdn = ((ridx[:, None] - 1 == ridx[None, :]) & same).astype(jnp.float32)
    Sup = ((ridx[:, None] + 1 == ridx[None, :]) & same).astype(jnp.float32)

    x_in = x.reshape(N, H, Wci)                           # (w, cin) flattened into lanes

    kernel = functools.partial(_residual_cnn_kernel, bb=bb, H=H, Wci=Wci, Cpad=Cpad)
    out = pl.pallas_call(
        kernel,
        out_shape=jax.ShapeDtypeStruct((N, H, Cpad), jnp.float32),
        grid=(N // bb,),
        in_specs=[
            pl.BlockSpec((bb, H, Wci), lambda n: (n, 0, 0)),
            pl.BlockSpec((Wci, 4 * Cpad), lambda n: (0, 0)),
            pl.BlockSpec((Cpad, 3 * Cpad), lambda n: (0, 0)),
            pl.BlockSpec((M, M), lambda n: (0, 0)),
            pl.BlockSpec((M, M), lambda n: (0, 0)),
            pl.BlockSpec((1, Cpad), lambda n: (0, 0)),
            pl.BlockSpec((1, Cpad), lambda n: (0, 0)),
        ],
        out_specs=pl.BlockSpec((bb, H, Cpad), lambda n: (n, 0, 0)),
        compiler_params=pltpu.CompilerParams(dimension_semantics=("parallel",)),
    )(x_in, B1, B2, Sdn, Sup, sh1, sho)

    out = out[..., :WCo].reshape(N, H, W, Cout)
    return jnp.transpose(out, (0, 3, 1, 2))               # back to NCHW


def residual_cnn_reference(x_nchw, params):
    """Pure-JAX reference (inference semantics) for validation."""
    x = jnp.transpose(x_nchw, (0, 2, 3, 1)).astype(jnp.float32)
    dn = ("NHWC", "HWIO", "NHWC")
    y = lax.conv_general_dilated(x, params["w1"], (1, 1), "SAME",
                                 dimension_numbers=dn) + params["b1"]
    y = (y - params["mean1"]) / jnp.sqrt(params["var1"] + EPS) * params["gamma1"] + params["beta1"]
    y = jnp.where(y > 0, y, LEAKY_SLOPE * y)
    y = lax.conv_general_dilated(y, params["w2"], (1, 1), "SAME",
                                 dimension_numbers=dn) + params["b2"]
    y = (y - params["mean2"]) / jnp.sqrt(params["var2"] + EPS) * params["gamma2"] + params["beta2"]
    r = lax.conv_general_dilated(x, params["wr"][None, None], (1, 1), "SAME",
                                 dimension_numbers=dn) + params["br"]
    out = jnp.maximum(y + r, 0.0)
    return jnp.transpose(out, (0, 3, 1, 2))


def init_params(key, cin, cout):
    ks = jax.random.split(key, 12)
    p = {
        "w1": jax.random.normal(ks[0], (3, 3, cin, cout), jnp.float32) * 0.1,
        "b1": jax.random.normal(ks[1], (cout,), jnp.float32) * 0.1,
        "gamma1": 1.0 + 0.1 * jax.random.normal(ks[2], (cout,), jnp.float32),
        "beta1": 0.1 * jax.random.normal(ks[3], (cout,), jnp.float32),
        "mean1": 0.1 * jax.random.normal(ks[4], (cout,), jnp.float32),
        "var1": jax.random.uniform(ks[5], (cout,), jnp.float32, 0.5, 1.5),
        "w2": jax.random.normal(ks[6], (3, 3, cout, cout), jnp.float32) * 0.1,
        "b2": jax.random.normal(ks[7], (cout,), jnp.float32) * 0.1,
        "gamma2": 1.0 + 0.1 * jax.random.normal(ks[8], (cout,), jnp.float32),
        "beta2": 0.1 * jax.random.normal(ks[9], (cout,), jnp.float32),
        "mean2": 0.1 * jax.random.normal(ks[10], (cout,), jnp.float32),
        "var2": jax.random.uniform(ks[11], (cout,), jnp.float32, 0.5, 1.5),
    }
    kr = jax.random.split(ks[0], 2)
    p["wr"] = jax.random.normal(kr[0], (cin, cout), jnp.float32) * 0.1
    p["br"] = jax.random.normal(kr[1], (cout,), jnp.float32) * 0.1
    return p


if __name__ == "__main__":
    N, CIN, COUT, H, W = 2, 4, 8, 16, 16
    key = jax.random.PRNGKey(0)
    k_x, k_p = jax.random.split(key)
    x = jax.random.normal(k_x, (N, CIN, H, W), jnp.float32)  # NCHW, like PyTorch
    params = init_params(k_p, CIN, COUT)

    out = jax.block_until_ready(residual_cnn_forward(x, params))
    ref = jax.block_until_ready(residual_cnn_reference(x, params))

    assert out.shape == (N, COUT, H, W), out.shape
    assert jnp.allclose(out, ref, rtol=1e-4, atol=1e-4), float(jnp.max(jnp.abs(out - ref)))
    print("KERNEL_OK")
</pallas_src>

<mosaic_0001>
module attributes {stable_mosaic.version = 11 : i64} {
  func.func @_residual_cnn_kernel(%arg0: i32, %arg1: memref<1x16x64xf32, #tpu.memory_space<vmem>>, %arg2: memref<64x512xf32, #tpu.memory_space<vmem>>, %arg3: memref<128x384xf32, #tpu.memory_space<vmem>>, %arg4: memref<16x16xf32, #tpu.memory_space<vmem>>, %arg5: memref<16x16xf32, #tpu.memory_space<vmem>>, %arg6: memref<1x128xf32, #tpu.memory_space<vmem>>, %arg7: memref<1x128xf32, #tpu.memory_space<vmem>>, %arg8: memref<1x16x128xf32, #tpu.memory_space<vmem>>) attributes {dimension_semantics = [#tpu.dimension_semantics<parallel>], iteration_bounds = array<i64: 2>, scalar_prefetch = 0 : i64, scratch_operands = 0 : i64, tpu.core_type = #tpu.core_type<tc>, window_params = [{transform_indices = @transform_0, window_bounds = array<i64: 1, 16, 64>}, {pipeline_mode = #tpu.pipeline_mode<synchronous>, transform_indices = @transform_1, window_bounds = array<i64: 64, 512>}, {pipeline_mode = #tpu.pipeline_mode<synchronous>, transform_indices = @transform_2, window_bounds = array<i64: 128, 384>}, {pipeline_mode = #tpu.pipeline_mode<synchronous>, transform_indices = @transform_3, window_bounds = array<i64: 16, 16>}, {pipeline_mode = #tpu.pipeline_mode<synchronous>, transform_indices = @transform_4, window_bounds = array<i64: 16, 16>}, {pipeline_mode = #tpu.pipeline_mode<synchronous>, transform_indices = @transform_5, window_bounds = array<i64: 1, 128>}, {pipeline_mode = #tpu.pipeline_mode<synchronous>, transform_indices = @transform_6, window_bounds = array<i64: 1, 128>}, {transform_indices = @transform_7, window_bounds = array<i64: 1, 16, 128>}]} {
    %c0 = arith.constant 0 : index
    %c0_0 = arith.constant 0 : index
    %c0_1 = arith.constant 0 : index
    %0 = vector.load %arg1[%c0, %c0_0, %c0_1] : memref<1x16x64xf32, #tpu.memory_space<vmem>>, vector<1x16x64xf32>
    %1 = vector.shape_cast %0 : vector<1x16x64xf32> to vector<16x64xf32>
    %c0_2 = arith.constant 0 : index
    %c0_3 = arith.constant 0 : index
    %2 = vector.load %arg4[%c0_2, %c0_3] : memref<16x16xf32, #tpu.memory_space<vmem>>, vector<16x16xf32>
    %c0_4 = arith.constant 0 : index
    %c0_5 = arith.constant 0 : index
    %3 = vector.load %arg5[%c0_4, %c0_5] : memref<16x16xf32, #tpu.memory_space<vmem>>, vector<16x16xf32>
    %c0_6 = arith.constant 0 : index
    %c0_7 = arith.constant 0 : index
    %4 = vector.load %arg2[%c0_6, %c0_7] : memref<64x512xf32, #tpu.memory_space<vmem>>, vector<64x512xf32>
    %cst = arith.constant dense<0.000000e+00> : vector<16x512xf32>
    %5 = tpu.matmul %1, %4, %cst {dimension_numbers = #tpu.dot_dimension_numbers<[1], [0], [0], [1], [0, 0, 1, 1], [], []>} : vector<16x64xf32>, vector<64x512xf32>, vector<16x512xf32> -> vector<16x512xf32>
    %6 = vector.extract_strided_slice %5 {offsets = [0, 0], sizes = [16, 128], strides = [1, 1]} : vector<16x512xf32> to vector<16x128xf32>
    %cst_8 = arith.constant dense<0.000000e+00> : vector<16x128xf32>
    %7 = tpu.matmul %2, %6, %cst_8 {dimension_numbers = #tpu.dot_dimension_numbers<[1], [0], [0], [1], [0, 0, 1, 1], [], []>} : vector<16x16xf32>, vector<16x128xf32>, vector<16x128xf32> -> vector<16x128xf32>
    %8 = vector.extract_strided_slice %5 {offsets = [0, 128], sizes = [16, 128], strides = [1, 1]} : vector<16x512xf32> to vector<16x128xf32>
    %9 = arith.addf %7, %8 : vector<16x128xf32>
    %10 = vector.extract_strided_slice %5 {offsets = [0, 256], sizes = [16, 128], strides = [1, 1]} : vector<16x512xf32> to vector<16x128xf32>
    %cst_9 = arith.constant dense<0.000000e+00> : vector<16x128xf32>
    %11 = tpu.matmul %3, %10, %cst_9 {dimension_numbers = #tpu.dot_dimension_numbers<[1], [0], [0], [1], [0, 0, 1, 1], [], []>} : vector<16x16xf32>, vector<16x128xf32>, vector<16x128xf32> -> vector<16x128xf32>
    %12 = arith.addf %9, %11 : vector<16x128xf32>
    %c0_10 = arith.constant 0 : index
    %c0_11 = arith.constant 0 : index
    %13 = vector.load %arg6[%c0_10, %c0_11] : memref<1x128xf32, #tpu.memory_space<vmem>>, vector<1x128xf32>
    %14 = vector.broadcast %13 : vector<1x128xf32> to vector<16x128xf32>
    %15 = arith.addf %12, %14 : vector<16x128xf32>
    %cst_12 = arith.constant 0.00999999977 : f32
    %16 = vector.broadcast %cst_12 : f32 to vector<16x128xf32>
    %17 = arith.mulf %16, %15 : vector<16x128xf32>
    %18 = arith.maximumf %15, %17 : vector<16x128xf32>
    %19 = vector.extract_strided_slice %5 {offsets = [0, 384], sizes = [16, 128], strides = [1, 1]} : vector<16x512xf32> to vector<16x128xf32>
    %c0_13 = arith.constant 0 : index
    %c0_14 = arith.constant 0 : index
    %20 = vector.load %arg3[%c0_13, %c0_14] : memref<128x384xf32, #tpu.memory_space<vmem>>, vector<128x384xf32>
    %cst_15 = arith.constant dense<0.000000e+00> : vector<16x384xf32>
    %21 = tpu.matmul %18, %20, %cst_15 {dimension_numbers = #tpu.dot_dimension_numbers<[1], [0], [0], [1], [0, 0, 1, 1], [], []>} : vector<16x128xf32>, vector<128x384xf32>, vector<16x384xf32> -> vector<16x384xf32>
    %22 = vector.extract_strided_slice %21 {offsets = [0, 0], sizes = [16, 128], strides = [1, 1]} : vector<16x384xf32> to vector<16x128xf32>
    %cst_16 = arith.constant dense<0.000000e+00> : vector<16x128xf32>
    %23 = tpu.matmul %2, %22, %cst_16 {dimension_numbers = #tpu.dot_dimension_numbers<[1], [0], [0], [1], [0, 0, 1, 1], [], []>} : vector<16x16xf32>, vector<16x128xf32>, vector<16x128xf32> -> vector<16x128xf32>
    %24 = vector.extract_strided_slice %21 {offsets = [0, 128], sizes = [16, 128], strides = [1, 1]} : vector<16x384xf32> to vector<16x128xf32>
    %25 = arith.addf %23, %24 : vector<16x128xf32>
    %26 = vector.extract_strided_slice %21 {offsets = [0, 256], sizes = [16, 128], strides = [1, 1]} : vector<16x384xf32> to vector<16x128xf32>
    %cst_17 = arith.constant dense<0.000000e+00> : vector<16x128xf32>
    %27 = tpu.matmul %3, %26, %cst_17 {dimension_numbers = #tpu.dot_dimension_numbers<[1], [0], [0], [1], [0, 0, 1, 1], [], []>} : vector<16x16xf32>, vector<16x128xf32>, vector<16x128xf32> -> vector<16x128xf32>
    %28 = arith.addf %25, %27 : vector<16x128xf32>
    %29 = arith.addf %28, %19 : vector<16x128xf32>
    %c0_18 = arith.constant 0 : index
    %c0_19 = arith.constant 0 : index
    %30 = vector.load %arg7[%c0_18, %c0_19] : memref<1x128xf32, #tpu.memory_space<vmem>>, vector<1x128xf32>
    %31 = vector.broadcast %30 : vector<1x128xf32> to vector<16x128xf32>
    %32 = arith.addf %29, %31 : vector<16x128xf32>
    %cst_20 = arith.constant 0.000000e+00 : f32
    %33 = vector.broadcast %cst_20 : f32 to vector<16x128xf32>
    %34 = arith.maximumf %32, %33 : vector<16x128xf32>
    %35 = vector.shape_cast %34 : vector<16x128xf32> to vector<1x16x128xf32>
    %c0_21 = arith.constant 0 : index
    %c0_22 = arith.constant 0 : index
    %c0_23 = arith.constant 0 : index
    %36 = vector.load %arg8[%c0_21, %c0_22, %c0_23] : memref<1x16x128xf32, #tpu.memory_space<vmem>>, vector<1x16x128xf32>
    tpu.vector_store %arg8[%c0_21, %c0_22, %c0_23], %35 {strides = array<i32>} : memref<1x16x128xf32, #tpu.memory_space<vmem>>, vector<1x16x128xf32>,
    return
  }
  func.func @transform_0(%arg0: i32) -> (i32, i32, i32) {
    %c0_i32 = arith.constant 0 : i32
    %c0_i32_0 = arith.constant 0 : i32
    %c0_i32_1 = arith.constant 0 : i32
    return %arg0, %c0_i32, %c0_i32_0 : i32, i32, i32
  }
  func.func @transform_1(%arg0: i32) -> (i32, i32) {
    %c0_i32 = arith.constant 0 : i32
    %c0_i32_0 = arith.constant 0 : i32
    %c0_i32_1 = arith.constant 0 : i32
    return %c0_i32, %c0_i32_0 : i32, i32
  }
  func.func @transform_2(%arg0: i32) -> (i32, i32) {
    %c0_i32 = arith.constant 0 : i32
    %c0_i32_0 = arith.constant 0 : i32
    %c0_i32_1 = arith.constant 0 : i32
    return %c0_i32, %c0_i32_0 : i32, i32
  }
  func.func @transform_3(%arg0: i32) -> (i32, i32) {
    %c0_i32 = arith.constant 0 : i32
    %c0_i32_0 = arith.constant 0 : i32
    %c0_i32_1 = arith.constant 0 : i32
    return %c0_i32, %c0_i32_0 : i32, i32
  }
  func.func @transform_4(%arg0: i32) -> (i32, i32) {
    %c0_i32 = arith.constant 0 : i32
    %c0_i32_0 = arith.constant 0 : i32
    %c0_i32_1 = arith.constant 0 : i32
    return %c0_i32, %c0_i32_0 : i32, i32
  }
  func.func @transform_5(%arg0: i32) -> (i32, i32) {
    %c0_i32 = arith.constant 0 : i32
    %c0_i32_0 = arith.constant 0 : i32
    %c0_i32_1 = arith.constant 0 : i32
    return %c0_i32, %c0_i32_0 : i32, i32
  }
  func.func @transform_6(%arg0: i32) -> (i32, i32) {
    %c0_i32 = arith.constant 0 : i32
    %c0_i32_0 = arith.constant 0 : i32
    %c0_i32_1 = arith.constant 0 : i32
    return %c0_i32, %c0_i32_0 : i32, i32
  }
  func.func @transform_7(%arg0: i32) -> (i32, i32, i32) {
    %c0_i32 = arith.constant 0 : i32
    %c0_i32_0 = arith.constant 0 : i32
    %c0_i32_1 = arith.constant 0 : i32
    return %arg0, %c0_i32, %c0_i32_0 : i32, i32, i32
  }
}

</mosaic_0001>

<llo_original>
// kernel: tpu_custom_call.1
$region0: #{tpu_custom_call.1}
  #allocation0 [shape = 'u32[]', space=smem, size = 0x4, offset = 0x4, fixed_abs, tag = 'smem constant byte address 0x4 - core index']
  #allocation1 [shape = 'u32[72,128]{1,0:T(1,128)}', space=vmem, size = 0x9000, scoped, tag = 'internal scratch']
  %s0 = inlined_call_operand.hbm [shape: f32[2,16,64], index: 0, kind: input, shape index: {}]
  %s1 = inlined_call_operand.hbm [shape: f32[64,512], index: 1, kind: input, shape index: {}]
  %s2 = inlined_call_operand.hbm [shape: f32[128,384], index: 2, kind: input, shape index: {}]
  %s3 = inlined_call_operand.hbm [shape: f32[16,16], index: 3, kind: input, shape index: {}]
  %s4 = inlined_call_operand.hbm [shape: f32[16,16], index: 4, kind: input, shape index: {}]
  %s5 = inlined_call_operand.vmem [shape: f32[1,128], index: 5, kind: input, shape index: {}]
  %s6 = inlined_call_operand.vmem [shape: f32[1,128], index: 6, kind: input, shape index: {}]
  %s7 = inlined_call_operand.hbm [shape: f32[2,16,128], index: 7, kind: output, shape index: {}]
  %s8 = sld [smem:[#allocation0]]
  $region81: #{tpu_custom_call.1} parent=0
    _
  %s10 = ssub.s32 1, %s8
  %s11 = scalar_select 0, %s10, %s8
  $region1: #{tpu_custom_call.1} parent=0
    #allocation2 [shape = 'u8[16384]{0}', space=vmem, size = 0x4000, scoped, tag = 'input window, operand 0']
    #allocation3 [shape = 's32[2]{0}', space=sflag, size = 0x8, scoped, tag = 'scoped memory for tpu_custom_call.1']
    #allocation4 [shape = 's32[2]{0}', space=sflag, size = 0x8, scoped, tag = 'scoped memory for tpu_custom_call.1']
    #allocation5 [shape = 'u8[131072]{0}', space=vmem, size = 0x20000, scoped, tag = 'input window, operand 1, single buffered']
    #allocation6 [shape = 's32[1]{0}', space=sflag, size = 0x4, scoped, tag = 'scoped memory for tpu_custom_call.1']
    #allocation7 [shape = 'u8[196608]{0}', space=vmem, size = 0x30000, scoped, tag = 'input window, operand 2, single buffered']
    #allocation8 [shape = 'u8[8192]{0}', space=vmem, size = 0x2000, scoped, tag = 'input window, operand 3, single buffered']
    #allocation9 [shape = 's32[1]{0}', space=sflag, size = 0x4, scoped, tag = 'scoped memory for tpu_custom_call.1']
    #allocation10 [shape = 'u8[8192]{0}', space=vmem, size = 0x2000, scoped, tag = 'input window, operand 4, single buffered']
    #allocation11 [shape = 'u8[16384]{0}', space=vmem, size = 0x4000, scoped, tag = 'output window, operand 0']
    %12 = vsyncpa [#allocation3], 0
    %s13 = scalar_lea.sflag [#allocation3], 1
    %14 = vsyncpa %s13, 0
    %15 = vsyncpa [#allocation6], 0
    %16 = vsyncpa [#allocation9], 0
    %17 = vsyncpa [#allocation4], 0
    %s18 = scalar_lea.sflag [#allocation4], 1
    %19 = vsyncpa %s18, 0
    loop: start=0, step=1, limit=4
    $region2: #{tpu_custom_call.1} parent=1 // loop_pre_header
      _
    $region3: #{tpu_custom_call.1} parent=1 // loop_header
      %s21 = sphi 0, %s25
      %p22 = scmp.ge.s32.totalorder %s21, 4
      %s31 = sphi 0, %s33
      %s34 = sphi 0, %s31
      %s35 = sphi 0, %s34
      %s51 = sphi 0, %s35
      %s55 = sphi 0, %s55
      %s57 = sphi 0, %s55
      %s58 = sphi 0, %s57
      %s72 = sphi 0, %s58
      %s76 = sphi 0, %s76
      %s78 = sphi 0, %s76
      %s79 = sphi 0, %s78
      %s93 = sphi 0, %s79
      %s97 = sphi 0, %s97
      %s99 = sphi 0, %s97
      %s100 = sphi 0, %s99
      %s114 = sphi 0, %s100
      %s118 = sphi 0, %s118
      %s120 = sphi 0, %s118
      %s121 = sphi 0, %s120
      %s135 = sphi 0, %s121
      %s139 = sphi 0, %s139
      %s141 = sphi 0, %s139
      %s142 = sphi 0, %s141
      %s156 = sphi 0, %s142
      %s160 = sphi 0, %s160
      %s162 = sphi 0, %s160
      %s163 = sphi 0, %s162
      %s177 = sphi 0, %s163
      %s183 = sphi 0, %s185
      %s186 = sphi 0, %s183
      %s187 = sphi 0, %s186
      %s203 = sphi 0, %s187
    $region4: #{tpu_custom_call.1} parent=1 // loop_header_branch
      %24 = sbr.rel (%p22) target = $region8
    $region5: #{tpu_custom_call.1} parent=1 // loop_body
      %s26 = ssub.s32 %s21, 1
      %s27 = ssub.s32 %s21, 2
      %s28 = sadd.s32 %s21, 1
      %s29 = ssub.s32 %s21, %s28
      %p30 = scmp.eq.s32.totalorder %s29, 0
      %s32 = sadd.s32 %s31, 1
      %s33 = scalar_select %p30, %s31, %s32
      %p36 = pneg %p30
      %p37 = scmp.eq.s32.totalorder %s21, 1
      %p38 = por %p36, %p37
      %p39 = scmp.ne.s32.totalorder %s31, %s34
      %p40 = scmp.eq.s32.totalorder %s21, 0
      %p41 = por %p39, %p40
      %p42 = scmp.ne.s32.totalorder %s31, %s34
      %p43 = scmp.eq.s32.totalorder %s26, 1
      %p44 = por %p42, %p43
      %p45 = scmp.ne.s32.totalorder %s34, %s35
      %p46 = scmp.eq.s32.totalorder %s26, 0
      %p47 = por %p45, %p46
      %p48 = scmp.ne.s32.totalorder %s34, %s35
      %p49 = scmp.eq.s32.totalorder %s27, 1
      %p50 = por %p48, %p49
      %p52 = scmp.ne.s32.totalorder %s35, %s51
      %p53 = scmp.eq.s32.totalorder %s27, 0
      %p54 = por %p52, %p53
      %s56 = sadd.s32 %s55, 1
      %p59 = scmp.eq.s32.totalorder %s21, 1
      %p60 = scmp.ne.s32.totalorder %s55, %s57
      %p61 = scmp.eq.s32.totalorder %s21, 0
      %p62 = por %p60, %p61
      %p63 = scmp.ne.s32.totalorder %s55, %s57
      %p64 = scmp.eq.s32.totalorder %s26, 1
      %p65 = por %p63, %p64
      %p66 = scmp.ne.s32.totalorder %s57, %s58
      %p67 = scmp.eq.s32.totalorder %s26, 0
      %p68 = por %p66, %p67
      %p69 = scmp.ne.s32.totalorder %s57, %s58
      %p70 = scmp.eq.s32.totalorder %s27, 1
      %p71 = por %p69, %p70
      %p73 = scmp.ne.s32.totalorder %s58, %s72
      %p74 = scmp.eq.s32.totalorder %s27, 0
      %p75 = por %p73, %p74
      %s77 = sadd.s32 %s76, 1
      %p80 = scmp.eq.s32.totalorder %s21, 1
      %p81 = scmp.ne.s32.totalorder %s76, %s78
      %p82 = scmp.eq.s32.totalorder %s21, 0
      %p83 = por %p81, %p82
      %p84 = scmp.ne.s32.totalorder %s76, %s78
      %p85 = scmp.eq.s32.totalorder %s26, 1
      %p86 = por %p84, %p85
      %p87 = scmp.ne.s32.totalorder %s78, %s79
      %p88 = scmp.eq.s32.totalorder %s26, 0
      %p89 = por %p87, %p88
      %p90 = scmp.ne.s32.totalorder %s78, %s79
      %p91 = scmp.eq.s32.totalorder %s27, 1
      %p92 = por %p90, %p91
      %p94 = scmp.ne.s32.totalorder %s79, %s93
      %p95 = scmp.eq.s32.totalorder %s27, 0
      %p96 = por %p94, %p95
      %s98 = sadd.s32 %s97, 1
      %p101 = scmp.eq.s32.totalorder %s21, 1
      %p102 = scmp.ne.s32.totalorder %s97, %s99
      %p103 = scmp.eq.s32.totalorder %s21, 0
      %p104 = por %p102, %p103
      %p105 = scmp.ne.s32.totalorder %s97, %s99
      %p106 = scmp.eq.s32.totalorder %s26, 1
      %p107 = por %p105, %p106
      %p108 = scmp.ne.s32.totalorder %s99, %s100
      %p109 = scmp.eq.s32.totalorder %s26, 0
      %p110 = por %p108, %p109
      %p111 = scmp.ne.s32.totalorder %s99, %s100
      %p112 = scmp.eq.s32.totalorder %s27, 1
      %p113 = por %p111, %p112
      %p115 = scmp.ne.s32.totalorder %s100, %s114
      %p116 = scmp.eq.s32.totalorder %s27, 0
      %p117 = por %p115, %p116
      %s119 = sadd.s32 %s118, 1
      %p122 = scmp.eq.s32.totalorder %s21, 1
      %p123 = scmp.ne.s32.totalorder %s118, %s120
      %p124 = scmp.eq.s32.totalorder %s21, 0
      %p125 = por %p123, %p124
      %p126 = scmp.ne.s32.totalorder %s118, %s120
      %p127 = scmp.eq.s32.totalorder %s26, 1
      %p128 = por %p126, %p127
      %p129 = scmp.ne.s32.totalorder %s120, %s121
      %p130 = scmp.eq.s32.totalorder %s26, 0
      %p131 = por %p129, %p130
      %p132 = scmp.ne.s32.totalorder %s120, %s121
      %p133 = scmp.eq.s32.totalorder %s27, 1
      %p134 = por %p132, %p133
      %p136 = scmp.ne.s32.totalorder %s121, %s135
      %p137 = scmp.eq.s32.totalorder %s27, 0
      %p138 = por %p136, %p137
      %s140 = sadd.s32 %s139, 1
      %p143 = scmp.eq.s32.totalorder %s21, 1
      %p144 = scmp.ne.s32.totalorder %s139, %s141
      %p145 = scmp.eq.s32.totalorder %s21, 0
      %p146 = por %p144, %p145
      %p147 = scmp.ne.s32.totalorder %s139, %s141
      %p148 = scmp.eq.s32.totalorder %s26, 1
      %p149 = por %p147, %p148
      %p150 = scmp.ne.s32.totalorder %s141, %s142
      %p151 = scmp.eq.s32.totalorder %s26, 0
      %p152 = por %p150, %p151
      %p153 = scmp.ne.s32.totalorder %s141, %s142
      %p154 = scmp.eq.s32.totalorder %s27, 1
      %p155 = por %p153, %p154
      %p157 = scmp.ne.s32.totalorder %s142, %s156
      %p158 = scmp.eq.s32.totalorder %s27, 0
      %p159 = por %p157, %p158
      %s161 = sadd.s32 %s160, 1
      %p164 = scmp.eq.s32.totalorder %s21, 1
      %p165 = scmp.ne.s32.totalorder %s160, %s162
      %p166 = scmp.eq.s32.totalorder %s21, 0
      %p167 = por %p165, %p166
      %p168 = scmp.ne.s32.totalorder %s160, %s162
      %p169 = scmp.eq.s32.totalorder %s26, 1
      %p170 = por %p168, %p169
      %p171 = scmp.ne.s32.totalorder %s162, %s163
      %p172 = scmp.eq.s32.totalorder %s26, 0
      %p173 = por %p171, %p172
      %p174 = scmp.ne.s32.totalorder %s162, %s163
      %p175 = scmp.eq.s32.totalorder %s27, 1
      %p176 = por %p174, %p175
      %p178 = scmp.ne.s32.totalorder %s163, %s177
      %p179 = scmp.eq.s32.totalorder %s27, 0
      %p180 = por %p178, %p179
      %s181 = ssub.s32 %s21, %s28
      %p182 = scmp.eq.s32.totalorder %s181, 0
      %s184 = sadd.s32 %s183, 1
      %s185 = scalar_select %p182, %s183, %s184
      %p188 = pneg %p182
      %p189 = scmp.eq.s32.totalorder %s21, 1
      %p190 = por %p188, %p189
      %p191 = scmp.ne.s32.totalorder %s183, %s186
      %p192 = scmp.eq.s32.totalorder %s21, 0
      %p193 = por %p191, %p192
      %p194 = scmp.ne.s32.totalorder %s183, %s186
      %p195 = scmp.eq.s32.totalorder %s26, 1
      %p196 = por %p194, %p195
      %p197 = scmp.ne.s32.totalorder %s186, %s187
      %p198 = scmp.eq.s32.totalorder %s26, 0
      %p199 = por %p197, %p198
      %p200 = scmp.ne.s32.totalorder %s186, %s187
      %p201 = scmp.eq.s32.totalorder %s27, 1
      %p202 = por %p200, %p201
      %p204 = scmp.ne.s32.totalorder %s187, %s203
      %p205 = scmp.eq.s32.totalorder %s27, 0
      %p206 = por %p204, %p205
      %p207 = scmp.le.s32.totalorder 1, %s21
      %p208 = scmp.lt.s32.totalorder %s21, 3
      %p209 = pnand %p207, %p208
      %p210 = pneg %p209
      // Predicated region
      $region9: #{tpu_custom_call.1} parent=5 // pred_check
        _
      $region10: #{tpu_custom_call.1} parent=5 // pred_check_branch
        %212 = sbr.rel (%p209) target = $region12
      $region11: #{tpu_custom_call.1} parent=5 // pred_region
        %s213 = ssub.s32 %s21, 1
        // Predicated region
        $region13: #{tpu_custom_call.1} parent=11 // pred_check
          %p214 = pneg %p68
        $region14: #{tpu_custom_call.1} parent=11 // pred_check_branch
          %216 = sbr.rel (%p214) target = $region16
        $region15: #{tpu_custom_call.1} parent=11 // pred_region
          %218 = vsyncadd [#allocation6], 0
          %s219 = sshll.u32 %s1, 4
          %s220 = int_to_ptr.hbm [resolvable:$true] %s219
          %s221 = sshll.u32 [#allocation5], 4
          %s222 = int_to_ptr.vmem [resolvable:$true] %s221
          %227 = dma.hbm_to_vmem [thread:$0]  %s220, 4096, %s222, [#allocation6], 512, 512, 32
        $region16: #{tpu_custom_call.1} parent=11 // pred_fallthru
          _
        // Predicated region
        $region17: #{tpu_custom_call.1} parent=11 // pred_check
          %p228 = pneg %p89
        $region18: #{tpu_custom_call.1} parent=11 // pred_check_branch
          %230 = sbr.rel (%p228) target = $region20
        $region19: #{tpu_custom_call.1} parent=11 // pred_region
          %232 = vsyncadd [#allocation6], 0
          %s233 = sshll.u32 %s2, 4
          %s234 = int_to_ptr.hbm [resolvable:$true] %s233
          %s235 = sshll.u32 [#allocation7], 4
          %s236 = int_to_ptr.vmem [resolvable:$true] %s235
          %241 = dma.hbm_to_vmem [thread:$0]  %s234, 6144, %s236, [#allocation6], 384, 384, 24
        $region20: #{tpu_custom_call.1} parent=11 // pred_fallthru
          _
        // Predicated region
        $region21: #{tpu_custom_call.1} parent=11 // pred_check
          %p242 = pneg %p110
        $region22: #{tpu_custom_call.1} parent=11 // pred_check_branch
          %244 = sbr.rel (%p242) target = $region24
        $region23: #{tpu_custom_call.1} parent=11 // pred_region
          %246 = vsyncadd [#allocation9], 0
          %s247 = sshll.u32 %s3, 4
          %s248 = int_to_ptr.hbm [resolvable:$true] %s247
          %s249 = sshll.u32 [#allocation8], 4
          %s250 = int_to_ptr.vmem [resolvable:$true] %s249
          %255 = dma.hbm_to_vmem [thread:$0]  %s248, 256, %s250, [#allocation9], 128, 128, 8
        $region24: #{tpu_custom_call.1} parent=11 // pred_fallthru
          _
        // Predicated region
        $region25: #{tpu_custom_call.1} parent=11 // pred_check
          %p256 = pneg %p131
        $region26: #{tpu_custom_call.1} parent=11 // pred_check_branch
          %258 = sbr.rel (%p256) target = $region28
        $region27: #{tpu_custom_call.1} parent=11 // pred_region
          %260 = vsyncadd [#allocation9], 0
          %s261 = sshll.u32 %s4, 4
          %s262 = int_to_ptr.hbm [resolvable:$true] %s261
          %s263 = sshll.u32 [#allocation10], 4
          %s264 = int_to_ptr.vmem [resolvable:$true] %s263
          %269 = dma.hbm_to_vmem [thread:$0]  %s262, 256, %s264, [#allocation9], 128, 128, 8
        $region28: #{tpu_custom_call.1} parent=11 // pred_fallthru
          _
        // Predicated region
        $region29: #{tpu_custom_call.1} parent=11 // pred_check
          %p270 = pneg %p152
        $region30: #{tpu_custom_call.1} parent=11 // pred_check_branch
          %272 = sbr.rel (%p270) target = $region32
        $region31: #{tpu_custom_call.1} parent=11 // pred_region
          _
        $region32: #{tpu_custom_call.1} parent=11 // pred_fallthru
          _
        // Predicated region
        $region33: #{tpu_custom_call.1} parent=11 // pred_check
          %p273 = pneg %p173
        $region34: #{tpu_custom_call.1} parent=11 // pred_check_branch
          %275 = sbr.rel (%p273) target = $region36
        $region35: #{tpu_custom_call.1} parent=11 // pred_region
          _
        $region36: #{tpu_custom_call.1} parent=11 // pred_fallthru
          _
      $region12: #{tpu_custom_call.1} parent=5 // pred_fallthru
        _
      %p276 = scmp.lt.s32.totalorder %s21, 2
      // Predicated region
      $region37: #{tpu_custom_call.1} parent=5 // pred_check
        %p277 = pneg %p276
      $region38: #{tpu_custom_call.1} parent=5 // pred_check_branch
        %279 = sbr.rel (%p277) target = $region40
      $region39: #{tpu_custom_call.1} parent=5 // pred_region
        // Predicated region
        $region41: #{tpu_custom_call.1} parent=39 // pred_check
          %p280 = pneg %p41
        $region42: #{tpu_custom_call.1} parent=39 // pred_check_branch
          %282 = sbr.rel (%p280) target = $region44
        $region43: #{tpu_custom_call.1} parent=39 // pred_region
          %s283 = sand.u32 %s31, 1
          %s284 = scalar_lea.sflag [#allocation3], %s283
          %s285 = sand.u32 %s31, 1
          %s286 = smul.addr %s285, 16
          %s287 = scalar_lea.vmem [#allocation2], %s286
          %289 = vsyncadd %s284, 0
          %s290 = smul.addr %s21, 2
          %s291 = smul.addr %s290, 8
          %s292 = scalar_lea.hbm %s0, %s291
          %s293 = sshll.u32 %s292, 4
          %s294 = int_to_ptr.hbm [resolvable:$true] %s293
          %s295 = sshll.u32 %s287, 4
          %s296 = int_to_ptr.vmem [resolvable:$true] %s295
          %301 = dma.hbm_to_vmem [thread:$0]  %s294, 256, %s296, %s284, 128, 128, 8
        $region44: #{tpu_custom_call.1} parent=39 // pred_fallthru
          _
      $region40: #{tpu_custom_call.1} parent=5 // pred_fallthru
        _
      %p302 = scmp.le.s32.totalorder 1, %s21
      %p303 = scmp.lt.s32.totalorder %s21, 3
      %p304 = pnand %p302, %p303
      %p305 = pneg %p304
      // Predicated region
      $region45: #{tpu_custom_call.1} parent=5 // pred_check
        _
      $region46: #{tpu_custom_call.1} parent=5 // pred_check_branch
        %307 = sbr.rel (%p304) target = $region48
      $region47: #{tpu_custom_call.1} parent=5 // pred_region
        %s308 = ssub.s32 %s21, 1
        %s309 = sand.u32 %s34, 1
        %s310 = scalar_lea.sflag [#allocation3], %s309
        %s311 = sand.u32 %s34, 1
        %s312 = smul.addr %s311, 16
        %s313 = scalar_lea.vmem [#allocation2], %s312
        // Predicated region
        $region49: #{tpu_custom_call.1} parent=47 // pred_check
          %p314 = pneg %p47
        $region50: #{tpu_custom_call.1} parent=47 // pred_check_branch
          %316 = sbr.rel (%p314) target = $region52
        $region51: #{tpu_custom_call.1} parent=47 // pred_region
          %318 = dma.done %s310, 256
        $region52: #{tpu_custom_call.1} parent=47 // pred_fallthru
          _
        // Predicated region
        $region53: #{tpu_custom_call.1} parent=47 // pred_check
          %p319 = pneg %p68
        $region54: #{tpu_custom_call.1} parent=47 // pred_check_branch
          %321 = sbr.rel (%p319) target = $region56
        $region55: #{tpu_custom_call.1} parent=47 // pred_region
          %323 = dma.done [#allocation6], 4096
        $region56: #{tpu_custom_call.1} parent=47 // pred_fallthru
          _
        // Predicated region
        $region57: #{tpu_custom_call.1} parent=47 // pred_check
          %p324 = pneg %p89
        $region58: #{tpu_custom_call.1} parent=47 // pred_check_branch
          %326 = sbr.rel (%p324) target = $region60
        $region59: #{tpu_custom_call.1} parent=47 // pred_region
          %328 = dma.done [#allocation6], 6144
        $region60: #{tpu_custom_call.1} parent=47 // pred_fallthru
          _
        // Predicated region
        $region61: #{tpu_custom_call.1} parent=47 // pred_check
          %p329 = pneg %p110
        $region62: #{tpu_custom_call.1} parent=47 // pred_check_branch
          %331 = sbr.rel (%p329) target = $region64
        $region63: #{tpu_custom_call.1} parent=47 // pred_region
          %333 = dma.done [#allocation9], 256
        $region64: #{tpu_custom_call.1} parent=47 // pred_fallthru
          _
        // Predicated region
        $region65: #{tpu_custom_call.1} parent=47 // pred_check
          %p334 = pneg %p131
        $region66: #{tpu_custom_call.1} parent=47 // pred_check_branch
          %336 = sbr.rel (%p334) target = $region68
        $region67: #{tpu_custom_call.1} parent=47 // pred_region
          %338 = dma.done [#allocation9], 256
        $region68: #{tpu_custom_call.1} parent=47 // pred_fallthru
          _
        %s339 = sand.u32 %s34, 1
        %s340 = scalar_lea.sflag [#allocation3], %s339
        %s341 = sand.u32 %s34, 1
        %s342 = smul.addr %s341, 16
        %s343 = scalar_lea.vmem [#allocation2], %s342
        %p344 = pneg %p47
        %p345 = pneg %p44
        %p346 = pneg %p68
        %p347 = pneg %p65
        %p348 = pneg %p89
        %p349 = pneg %p86
        %p350 = pneg %p110
        %p351 = pneg %p107
        %p352 = pneg %p131
        %p353 = pneg %p128
        %p354 = pneg %p152
        %p355 = pneg %p149
        %p356 = pneg %p173
        %p357 = pneg %p170
        %p358 = pneg %p199
        %p359 = pneg %p196
        %s360 = sand.u32 %s186, 1
        %s361 = scalar_lea.sflag [#allocation4], %s360
        %s362 = sand.u32 %s186, 1
        %s363 = smul.addr %s362, 16
        %s364 = scalar_lea.vmem [#allocation11], %s363
        %v365 = vld [vmem:[%s313] sm:$0xff]
        %v366 = vld [vmem:[%s313 + $0x8] sm:$0xff]
        %v367 = vld [vmem:[#allocation8] sm:$0xff]
        %v368 = vld [vmem:[#allocation8 + $0x8] sm:$0xff]
        %v369 = vld [vmem:[#allocation10] sm:$0xff]
        %v370 = vld [vmem:[#allocation10 + $0x8] sm:$0xff]
        %v371 = vld [vmem:[#allocation5] sm:$0xff]
        %v372 = vld [vmem:[#allocation5 + $0x8] sm:$0xff]
        %v373 = vld [vmem:[#allocation5 + $0x10] sm:$0xff]
        %v374 = vld [vmem:[#allocation5 + $0x18] sm:$0xff]
        %v375 = vld [vmem:[#allocation5 + $0x20] sm:$0xff]
        %v376 = vld [vmem:[#allocation5 + $0x28] sm:$0xff]
        %v377 = vld [vmem:[#allocation5 + $0x30] sm:$0xff]
        %v378 = vld [vmem:[#allocation5 + $0x38] sm:$0xff]
        %v379 = vld [vmem:[#allocation5 + $0x40] sm:$0xff]
        %v380 = vld [vmem:[#allocation5 + $0x48] sm:$0xff]
        %v381 = vld [vmem:[#allocation5 + $0x50] sm:$0xff]
        %v382 = vld [vmem:[#allocation5 + $0x58] sm:$0xff]
        %v383 = vld [vmem:[#allocation5 + $0x60] sm:$0xff]
        %v384 = vld [vmem:[#allocation5 + $0x68] sm:$0xff]
        %v385 = vld [vmem:[#allocation5 + $0x70] sm:$0xff]
        %v386 = vld [vmem:[#allocation5 + $0x78] sm:$0xff]
        %v387 = vld [vmem:[#allocation5 + $0x80] sm:$0xff]
        %v388 = vld [vmem:[#allocation5 + $0x88] sm:$0xff]
        %v389 = vld [vmem:[#allocation5 + $0x90] sm:$0xff]
        %v390 = vld [vmem:[#allocation5 + $0x98] sm:$0xff]
        %v391 = vld [vmem:[#allocation5 + $0xa0] sm:$0xff]
        %v392 = vld [vmem:[#allocation5 + $0xa8] sm:$0xff]
        %v393 = vld [vmem:[#allocation5 + $0xb0] sm:$0xff]
        %v394 = vld [vmem:[#allocation5 + $0xb8] sm:$0xff]
        %v395 = vld [vmem:[#allocation5 + $0xc0] sm:$0xff]
        %v396 = vld [vmem:[#allocation5 + $0xc8] sm:$0xff]
        %v397 = vld [vmem:[#allocation5 + $0xd0] sm:$0xff]
        %v398 = vld [vmem:[#allocation5 + $0xd8] sm:$0xff]
        %v399 = vld [vmem:[#allocation5 + $0xe0] sm:$0xff]
        %v400 = vld [vmem:[#allocation5 + $0xe8] sm:$0xff]
        %v401 = vld [vmem:[#allocation5 + $0xf0] sm:$0xff]
        %v402 = vld [vmem:[#allocation5 + $0xf8] sm:$0xff]
        %vm403 = vcmask 523264
        %v405 = vsel %vm403, %v365, 0
        %v408 = vsel %vm403, %v366, 0
        %410 = vmatpush.msra.mxu0 0.0
        %411 = vmatpush.msra.mxu0 0.0
        %412 = vmatpush.msra.mxu0 0.0
        %413 = vmatpush.msra.mxu0 0.0
        %414 = vmatpush.msra.mxu0 0.0
        %415 = vmatpush.msra.mxu0 0.0
        %416 = vmatpush.msra.mxu0 0.0
        %417 = vmatpush.msra.mxu0 0.0
        %418 = vmatpush.msra.mxu0 %v399
        %419 = vmatpush.msra.mxu0 %v395
        %420 = vmatpush.msra.mxu0 %v391
        %421 = vmatpush.msra.mxu0 %v387
        %422 = vmatpush.msra.mxu0 %v383
        %423 = vmatpush.msra.mxu0 %v379
        %424 = vmatpush.msra.mxu0 %v375
        %425 = vmatpush.msra.mxu0 %v371
        %426 = vmatmul.f32.gmra.mxu0 %v405
        %v427 = vpop.f32.mrf.mxu0
        %v428 = vadd.f32 0.0, %v427
        %429 = vmatmul.f32.gmra.mxu0 %v408
        %v430 = vpop.f32.mrf.mxu0
        %v431 = vadd.f32 0.0, %v430
        %432 = vdwg.mxu0
        %433 = vmatpush.msra.mxu0 0.0
        %434 = vmatpush.msra.mxu0 0.0
        %435 = vmatpush.msra.mxu0 0.0
        %436 = vmatpush.msra.mxu0 0.0
        %437 = vmatpush.msra.mxu0 0.0
        %438 = vmatpush.msra.mxu0 0.0
        %439 = vmatpush.msra.mxu0 0.0
        %440 = vmatpush.msra.mxu0 0.0
        %441 = vmatpush.msra.mxu0 %v400
        %442 = vmatpush.msra.mxu0 %v396
        %443 = vmatpush.msra.mxu0 %v392
        %444 = vmatpush.msra.mxu0 %v388
        %445 = vmatpush.msra.mxu0 %v384
        %446 = vmatpush.msra.mxu0 %v380
        %447 = vmatpush.msra.mxu0 %v376
        %448 = vmatpush.msra.mxu0 %v372
        %449 = vmatmul.f32.gmra.mxu0 %v405
        %v450 = vpop.f32.mrf.mxu0
        %v451 = vadd.f32 0.0, %v450
        %452 = vmatmul.f32.gmra.mxu0 %v408
        %v453 = vpop.f32.mrf.mxu0
        %v454 = vadd.f32 0.0, %v453
        %455 = vdwg.mxu0
        %456 = vmatpush.msra.mxu0 0.0
        %457 = vmatpush.msra.mxu0 0.0
        %458 = vmatpush.msra.mxu0 0.0
        %459 = vmatpush.msra.mxu0 0.0
        %460 = vmatpush.msra.mxu0 0.0
        %461 = vmatpush.msra.mxu0 0.0
        %462 = vmatpush.msra.mxu0 0.0
        %463 = vmatpush.msra.mxu0 0.0
        %464 = vmatpush.msra.mxu0 %v401
        %465 = vmatpush.msra.mxu0 %v397
        %466 = vmatpush.msra.mxu0 %v393
        %467 = vmatpush.msra.mxu0 %v389
        %468 = vmatpush.msra.mxu0 %v385
        %469 = vmatpush.msra.mxu0 %v381
        %470 = vmatpush.msra.mxu0 %v377
        %471 = vmatpush.msra.mxu0 %v373
        %472 = vmatmul.f32.gmra.mxu0 %v405
        %v473 = vpop.f32.mrf.mxu0
        %v474 = vadd.f32 0.0, %v473
        %475 = vmatmul.f32.gmra.mxu0 %v408
        %v476 = vpop.f32.mrf.mxu0
        %v477 = vadd.f32 0.0, %v476
        %478 = vdwg.mxu0
        %479 = vmatpush.msra.mxu0 0.0
        %480 = vmatpush.msra.mxu0 0.0
        %481 = vmatpush.msra.mxu0 0.0
        %482 = vmatpush.msra.mxu0 0.0
        %483 = vmatpush.msra.mxu0 0.0
        %484 = vmatpush.msra.mxu0 0.0
        %485 = vmatpush.msra.mxu0 0.0
        %486 = vmatpush.msra.mxu0 0.0
        %487 = vmatpush.msra.mxu0 %v402
        %488 = vmatpush.msra.mxu0 %v398
        %489 = vmatpush.msra.mxu0 %v394
        %490 = vmatpush.msra.mxu0 %v390
        %491 = vmatpush.msra.mxu0 %v386
        %492 = vmatpush.msra.mxu0 %v382
        %493 = vmatpush.msra.mxu0 %v378
        %494 = vmatpush.msra.mxu0 %v374
        %495 = vmatmul.f32.gmra.mxu0 %v405
        %v496 = vpop.f32.mrf.mxu0
        %v497 = vadd.f32 0.0, %v496
        %498 = vmatmul.f32.gmra.mxu0 %v408
        %v499 = vpop.f32.mrf.mxu0
        %v500 = vadd.f32 0.0, %v499
        %501 = vdwg.mxu0
        %vm502 = vcmask 130048
        %v504 = vsel %vm502, %v367, 0
        %v507 = vsel %vm502, %v368, 0
        %509 = vmatpush.msra.mxu0 0.0
        %510 = vmatpush.msra.mxu0 0.0
        %511 = vmatpush.msra.mxu0 0.0
        %512 = vmatpush.msra.mxu0 0.0
        %513 = vmatpush.msra.mxu0 0.0
        %514 = vmatpush.msra.mxu0 0.0
        %515 = vmatpush.msra.mxu0 0.0
        %516 = vmatpush.msra.mxu0 0.0
        %517 = vmatpush.msra.mxu0 0.0
        %518 = vmatpush.msra.mxu0 0.0
        %519 = vmatpush.msra.mxu0 0.0
        %520 = vmatpush.msra.mxu0 0.0
        %521 = vmatpush.msra.mxu0 0.0
        %522 = vmatpush.msra.mxu0 0.0
        %523 = vmatpush.msra.mxu0 %v431
        %524 = vmatpush.msra.mxu0 %v428
        %525 = vmatmul.f32.gmra.mxu0 %v504
        %v526 = vpop.f32.mrf.mxu0
        %v527 = vadd.f32 %v451, %v526
        %528 = vmatmul.f32.gmra.mxu0 %v507
        %v529 = vpop.f32.mrf.mxu0
        %v530 = vadd.f32 %v454, %v529
        %531 = vdwg.mxu0
        %v533 = vsel %vm502, %v369, 0
        %v536 = vsel %vm502, %v370, 0
        %538 = vmatpush.msra.mxu0 0.0
        %539 = vmatpush.msra.mxu0 0.0
        %540 = vmatpush.msra.mxu0 0.0
        %541 = vmatpush.msra.mxu0 0.0
        %542 = vmatpush.msra.mxu0 0.0
        %543 = vmatpush.msra.mxu0 0.0
        %544 = vmatpush.msra.mxu0 0.0
        %545 = vmatpush.msra.mxu0 0.0
        %546 = vmatpush.msra.mxu0 0.0
        %547 = vmatpush.msra.mxu0 0.0
        %548 = vmatpush.msra.mxu0 0.0
        %549 = vmatpush.msra.mxu0 0.0
        %550 = vmatpush.msra.mxu0 0.0
        %551 = vmatpush.msra.mxu0 0.0
        %552 = vmatpush.msra.mxu0 %v477
        %553 = vmatpush.msra.mxu0 %v474
        %554 = vmatmul.f32.gmra.mxu0 %v533
        %v555 = vpop.f32.mrf.mxu0
        %v556 = vadd.f32 0.0, %v555
        %557 = vmatmul.f32.gmra.mxu0 %v536
        %v558 = vpop.f32.mrf.mxu0
        %v559 = vadd.f32 0.0, %v558
        %560 = vdwg.mxu0
        %v561 = vadd.f32 %v527, %v556
        %v562 = vadd.f32 %v530, %v559
        %v563 = vld [vmem:[%s5] sm:$0x1]
        %v565 = vperm.slane %v563, 0
        %v567 = vadd.f32 %v561, %v565
        %v568 = vadd.f32 %v562, %v565
        %v569 = vmul.f32 %v567, 0.01
        %v570 = vmul.f32 %v568, 0.01
        %v571 = vmax.f32 %v567, %v569
        %v572 = vmax.f32 %v568, %v570
        %v573 = vld [vmem:[#allocation7] sm:$0xff]
        %v574 = vld [vmem:[#allocation7 + $0x8] sm:$0xff]
        %v575 = vld [vmem:[#allocation7 + $0x10] sm:$0xff]
        %v576 = vld [vmem:[#allocation7 + $0x18] sm:$0xff]
        %v577 = vld [vmem:[#allocation7 + $0x20] sm:$0xff]
        %v578 = vld [vmem:[#allocation7 + $0x28] sm:$0xff]
        %v579 = vld [vmem:[#allocation7 + $0x30] sm:$0xff]
        %v580 = vld [vmem:[#allocation7 + $0x38] sm:$0xff]
        %v581 = vld [vmem:[#allocation7 + $0x40] sm:$0xff]
        %v582 = vld [vmem:[#allocation7 + $0x48] sm:$0xff]
        %v583 = vld [vmem:[#allocation7 + $0x50] sm:$0xff]
        %v584 = vld [vmem:[#allocation7 + $0x58] sm:$0xff]
        %v585 = vld [vmem:[#allocation7 + $0x60] sm:$0xff]
        %v586 = vld [vmem:[#allocation7 + $0x68] sm:$0xff]
        %v587 = vld [vmem:[#allocation7 + $0x70] sm:$0xff]
        %v588 = vld [vmem:[#allocation7 + $0x78] sm:$0xff]
        %v589 = vld [vmem:[#allocation7 + $0x80] sm:$0xff]
        %v590 = vld [vmem:[#allocation7 + $0x88] sm:$0xff]
        %v591 = vld [vmem:[#allocation7 + $0x90] sm:$0xff]
        %v592 = vld [vmem:[#allocation7 + $0x98] sm:$0xff]
        %v593 = vld [vmem:[#allocation7 + $0xa0] sm:$0xff]
        %v594 = vld [vmem:[#allocation7 + $0xa8] sm:$0xff]
        %v595 = vld [vmem:[#allocation7 + $0xb0] sm:$0xff]
        %v596 = vld [vmem:[#allocation7 + $0xb8] sm:$0xff]
        %v597 = vld [vmem:[#allocation7 + $0xc0] sm:$0xff]
        %v598 = vld [vmem:[#allocation7 + $0xc8] sm:$0xff]
        %v599 = vld [vmem:[#allocation7 + $0xd0] sm:$0xff]
        %v600 = vld [vmem:[#allocation7 + $0xd8] sm:$0xff]
        %v601 = vld [vmem:[#allocation7 + $0xe0] sm:$0xff]
        %v602 = vld [vmem:[#allocation7 + $0xe8] sm:$0xff]
        %v603 = vld [vmem:[#allocation7 + $0xf0] sm:$0xff]
        %v604 = vld [vmem:[#allocation7 + $0xf8] sm:$0xff]
        %v605 = vld [vmem:[#allocation7 + $0x100] sm:$0xff]
        %v606 = vld [vmem:[#allocation7 + $0x108] sm:$0xff]
        %v607 = vld [vmem:[#allocation7 + $0x110] sm:$0xff]
        %v608 = vld [vmem:[#allocation7 + $0x118] sm:$0xff]
        %v609 = vld [vmem:[#allocation7 + $0x120] sm:$0xff]
        %v610 = vld [vmem:[#allocation7 + $0x128] sm:$0xff]
        %v611 = vld [vmem:[#allocation7 + $0x130] sm:$0xff]
        %v612 = vld [vmem:[#allocation7 + $0x138] sm:$0xff]
        %v613 = vld [vmem:[#allocation7 + $0x140] sm:$0xff]
        %v614 = vld [vmem:[#allocation7 + $0x148] sm:$0xff]
        %v615 = vld [vmem:[#allocation7 + $0x150] sm:$0xff]
        %v616 = vld [vmem:[#allocation7 + $0x158] sm:$0xff]
        %v617 = vld [vmem:[#allocation7 + $0x160] sm:$0xff]
        %v618 = vld [vmem:[#allocation7 + $0x168] sm:$0xff]
        %v619 = vld [vmem:[#allocation7 + $0x170] sm:$0xff]
        %v620 = vld [vmem:[#allocation7 + $0x178] sm:$0xff]
        %621 = vmatpush.msra.mxu0 %v618
        %622 = vmatpush.msra.mxu0 %v615
        %623 = vmatpush.msra.mxu0 %v612
        %624 = vmatpush.msra.mxu0 %v609
        %625 = vmatpush.msra.mxu0 %v606
        %626 = vmatpush.msra.mxu0 %v603
        %627 = vmatpush.msra.mxu0 %v600
        %628 = vmatpush.msra.mxu0 %v597
        %629 = vmatpush.msra.mxu0 %v594
        %630 = vmatpush.msra.mxu0 %v591
        %631 = vmatpush.msra.mxu0 %v588
        %632 = vmatpush.msra.mxu0 %v585
        %633 = vmatpush.msra.mxu0 %v582
        %634 = vmatpush.msra.mxu0 %v579
        %635 = vmatpush.msra.mxu0 %v576
        %636 = vmatpush.msra.mxu0 %v573
        %637 = vmatmul.f32.gmra.mxu0 %v571
        %v638 = vpop.f32.mrf.mxu0
        %v639 = vadd.f32 0.0, %v638
        %640 = vmatmul.f32.gmra.mxu0 %v572
        %v641 = vpop.f32.mrf.mxu0
        %v642 = vadd.f32 0.0, %v641
        %643 = vdwg.mxu0
        %644 = vmatpush.msra.mxu0 %v619
        %645 = vmatpush.msra.mxu0 %v616
        %646 = vmatpush.msra.mxu0 %v613
        %647 = vmatpush.msra.mxu0 %v610
        %648 = vmatpush.msra.mxu0 %v607
        %649 = vmatpush.msra.mxu0 %v604
        %650 = vmatpush.msra.mxu0 %v601
        %651 = vmatpush.msra.mxu0 %v598
        %652 = vmatpush.msra.mxu0 %v595
        %653 = vmatpush.msra.mxu0 %v592
        %654 = vmatpush.msra.mxu0 %v589
        %655 = vmatpush.msra.mxu0 %v586
        %656 = vmatpush.msra.mxu0 %v583
        %657 = vmatpush.msra.mxu0 %v580
        %658 = vmatpush.msra.mxu0 %v577
        %659 = vmatpush.msra.mxu0 %v574
        %660 = vmatmul.f32.gmra.mxu0 %v571
        %v661 = vpop.f32.mrf.mxu0
        %v662 = vadd.f32 0.0, %v661
        %663 = vmatmul.f32.gmra.mxu0 %v572
        %v664 = vpop.f32.mrf.mxu0
        %v665 = vadd.f32 0.0, %v664
        %666 = vdwg.mxu0
        %667 = vmatpush.msra.mxu0 %v620
        %668 = vmatpush.msra.mxu0 %v617
        %669 = vmatpush.msra.mxu0 %v614
        %670 = vmatpush.msra.mxu0 %v611
        %671 = vmatpush.msra.mxu0 %v608
        %672 = vmatpush.msra.mxu0 %v605
        %673 = vmatpush.msra.mxu0 %v602
        %674 = vmatpush.msra.mxu0 %v599
        %675 = vmatpush.msra.mxu0 %v596
        %676 = vmatpush.msra.mxu0 %v593
        %677 = vmatpush.msra.mxu0 %v590
        %678 = vmatpush.msra.mxu0 %v587
        %679 = vmatpush.msra.mxu0 %v584
        %680 = vmatpush.msra.mxu0 %v581
        %681 = vmatpush.msra.mxu0 %v578
        %682 = vmatpush.msra.mxu0 %v575
        %683 = vmatmul.f32.gmra.mxu0 %v571
        %v684 = vpop.f32.mrf.mxu0
        %v685 = vadd.f32 0.0, %v684
        %686 = vmatmul.f32.gmra.mxu0 %v572
        %v687 = vpop.f32.mrf.mxu0
        %v688 = vadd.f32 0.0, %v687
        %689 = vdwg.mxu0
        %690 = vmatpush.msra.mxu0 0.0
        %691 = vmatpush.msra.mxu0 0.0
        %692 = vmatpush.msra.mxu0 0.0
        %693 = vmatpush.msra.mxu0 0.0
        %694 = vmatpush.msra.mxu0 0.0
        %695 = vmatpush.msra.mxu0 0.0
        %696 = vmatpush.msra.mxu0 0.0
        %697 = vmatpush.msra.mxu0 0.0
        %698 = vmatpush.msra.mxu0 0.0
        %699 = vmatpush.msra.mxu0 0.0
        %700 = vmatpush.msra.mxu0 0.0
        %701 = vmatpush.msra.mxu0 0.0
        %702 = vmatpush.msra.mxu0 0.0
        %703 = vmatpush.msra.mxu0 0.0
        %704 = vmatpush.msra.mxu0 %v642
        %705 = vmatpush.msra.mxu0 %v639
        %706 = vmatmul.f32.gmra.mxu0 %v504
        %v707 = vpop.f32.mrf.mxu0
        %v708 = vadd.f32 %v662, %v707
        %709 = vmatmul.f32.gmra.mxu0 %v507
        %v710 = vpop.f32.mrf.mxu0
        %v711 = vadd.f32 %v665, %v710
        %712 = vdwg.mxu0
        %713 = vmatpush.msra.mxu0 0.0
        %714 = vmatpush.msra.mxu0 0.0
        %715 = vmatpush.msra.mxu0 0.0
        %716 = vmatpush.msra.mxu0 0.0
        %717 = vmatpush.msra.mxu0 0.0
        %718 = vmatpush.msra.mxu0 0.0
        %719 = vmatpush.msra.mxu0 0.0
        %720 = vmatpush.msra.mxu0 0.0
        %721 = vmatpush.msra.mxu0 0.0
        %722 = vmatpush.msra.mxu0 0.0
        %723 = vmatpush.msra.mxu0 0.0
        %724 = vmatpush.msra.mxu0 0.0
        %725 = vmatpush.msra.mxu0 0.0
        %726 = vmatpush.msra.mxu0 0.0
        %727 = vmatpush.msra.mxu0 %v688
        %728 = vmatpush.msra.mxu0 %v685
        %729 = vmatmul.f32.gmra.mxu0 %v533
        %v730 = vpop.f32.mrf.mxu0
        %v731 = vadd.f32 0.0, %v730
        %732 = vmatmul.f32.gmra.mxu0 %v536
        %v733 = vpop.f32.mrf.mxu0
        %v734 = vadd.f32 0.0, %v733
        %735 = vdwg.mxu0
        %v736 = vadd.f32 %v708, %v731
        %v737 = vadd.f32 %v711, %v734
        %v738 = vadd.f32 %v736, %v497
        %v739 = vadd.f32 %v737, %v500
        %v740 = vld [vmem:[%s6] sm:$0x1]
        %v742 = vperm.slane %v740, 0
        %v744 = vadd.f32 %v738, %v742
        %v745 = vadd.f32 %v739, %v742
        %v746 = vmax.f32 %v744, 0.0
        %v747 = vmax.f32 %v745, 0.0
        %748 = vst [vmem:[%s364] sm:$0xff] %v746
        %749 = vst [vmem:[%s364 + $0x8] sm:$0xff] %v747
        %s750 = sand.u32 %s186, 1
        %s751 = scalar_lea.sflag [#allocation4], %s750
        %s752 = sand.u32 %s186, 1
        %s753 = smul.addr %s752, 16
        %s754 = scalar_lea.vmem [#allocation11], %s753
        // Predicated region
        $region69: #{tpu_custom_call.1} parent=47 // pred_check
          %p755 = pneg %p196
        $region70: #{tpu_custom_call.1} parent=47 // pred_check_branch
          %757 = sbr.rel (%p755) target = $region72
        $region71: #{tpu_custom_call.1} parent=47 // pred_region
          %759 = vsyncadd %s751, 0
          %s760 = smul.addr %s26, 2
          %s761 = smul.addr %s760, 8
          %s762 = scalar_lea.hbm %s7, %s761
          %s763 = sshll.u32 %s754, 4
          %s764 = int_to_ptr.vmem [resolvable:$true] %s763
          %s765 = sshll.u32 %s762, 4
          %s766 = int_to_ptr.hbm [resolvable:$true] %s765
          %771 = dma.vmem_to_hbm [thread:$0]  %s764, 256, %s766, %s751, 128, 128, 8
        $region72: #{tpu_custom_call.1} parent=47 // pred_fallthru
          _
      $region48: #{tpu_custom_call.1} parent=5 // pred_fallthru
        _
      %p772 = scmp.le.s32.totalorder 2, %s21
      // Predicated region
      $region73: #{tpu_custom_call.1} parent=5 // pred_check
        %p773 = pneg %p772
      $region74: #{tpu_custom_call.1} parent=5 // pred_check_branch
        %775 = sbr.rel (%p773) target = $region76
      $region75: #{tpu_custom_call.1} parent=5 // pred_region
        %s776 = ssub.s32 %s21, 2
        // Predicated region
        $region77: #{tpu_custom_call.1} parent=75 // pred_check
          %p777 = pneg %p202
        $region78: #{tpu_custom_call.1} parent=75 // pred_check_branch
          %779 = sbr.rel (%p777) target = $region80
        $region79: #{tpu_custom_call.1} parent=75 // pred_region
          %s780 = sand.u32 %s187, 1
          %s781 = scalar_lea.sflag [#allocation4], %s780
          %s782 = sand.u32 %s187, 1
          %s783 = smul.addr %s782, 16
          %s784 = scalar_lea.vmem [#allocation11], %s783
          %786 = dma.done %s781, 256
        $region80: #{tpu_custom_call.1} parent=75 // pred_fallthru
          _
      $region76: #{tpu_custom_call.1} parent=5 // pred_fallthru
        _
    $region6: #{tpu_custom_call.1} parent=1 // loop_footer
      %s25 = sadd.s32 1, %s21
    $region7: #{tpu_custom_call.1} parent=1 // loop_footer_branch
      %20 = sbr.rel target = $region3
    $region8: #{tpu_custom_call.1} parent=1 // loop_exit
      _
    %787 = vsyncpa [#allocation3], 1
    %s788 = scalar_lea.sflag [#allocation3], 1
    %789 = vsyncpa %s788, 1
    %790 = vsyncpa [#allocation6], 1
    %791 = vsyncpa [#allocation9], 1
    %792 = vsyncpa [#allocation4], 1
    %s793 = scalar_lea.sflag [#allocation4], 1
    %794 = vsyncpa %s793, 1

</llo_original>
